<compile_context>
chip_gen: v6e
topology: v6e:2x2x1
jax: 0.10.0
libtpu: 0.0.40
codegen_flags: <defaults>
</compile_context>

<pallas_src>
import jax
import jax.numpy as jnp
from jax.experimental import pallas as pl
from jax.experimental.pallas import tpu as pltpu


def add_kernel(a_ref, b_ref, o_ref):
    o_ref[...] = a_ref[...] + b_ref[...]


_SMALL_BYTES = 1 << 20        # <= 1 MiB per array: single block, no grid
_PER_BUF_BUDGET = 4 << 20     # ~4 MiB per double-buffered stream buffer
_VMEM_LIMIT = 48 << 20        # scoped-VMEM limit; < physical on v5e/v6e/v7x


def _cost(M, N, itemsize):
    return pl.CostEstimate(flops=M * N, transcendentals=0,
                           bytes_accessed=3 * M * N * itemsize)


def _pallas_add_2d(a, b):
    M, N = a.shape
    itemsize = jnp.dtype(a.dtype).itemsize
    total_bytes = M * N * itemsize

    # --- Fast path: whole problem in VMEM in one shot. ---
    if total_bytes <= _SMALL_BYTES:
        return pl.pallas_call(
            add_kernel,
            out_shape=jax.ShapeDtypeStruct((M, N), a.dtype),
            cost_estimate=_cost(M, N, itemsize),
        )(a, b)

    # --- Tiled path: 2-D grid of lane-dense ~4 MiB blocks. ---
    # Dtype-aware sublane alignment: 8 (f32), 16 (bf16), 32 (int8/fp8).
    sub_align = max((8 * 4) // itemsize, 8)

    # Lane-axis tile: keep the full row when sub_align rows of it fit the
    # per-buffer budget; otherwise tile N in multiples of 128.
    row_bytes = N * itemsize
    if row_bytes * sub_align <= _PER_BUF_BUDGET:
        tn = N
    else:
        lanes_budget = _PER_BUF_BUDGET // (sub_align * itemsize)
        tn = max((lanes_budget // 128) * 128, 128)
        tn = min(tn, N)

    # Row-axis tile sized so one (tm, tn) buffer is ~_PER_BUF_BUDGET.
    tile_row_bytes = tn * itemsize
    rows_budget = max(_PER_BUF_BUDGET // tile_row_bytes, 1)
    tm = max((rows_budget // sub_align) * sub_align, sub_align)
    tm = min(tm, M)

    gm, gn = pl.cdiv(M, tm), pl.cdiv(N, tn)

    # v7x: a small odd grid leaves one of the two TensorCores idle for part
    # of the work; bump the row grid to an even block count when cheap.
    if (gm * gn) % 2 == 1 and gm * gn <= 7 and M >= 2 * sub_align:
        tm_cand = pl.cdiv(M, gm + 1)
        tm_cand = min(pl.cdiv(tm_cand, sub_align) * sub_align, M)
        if pl.cdiv(M, tm_cand) % 2 == 0:
            tm = tm_cand
            gm = pl.cdiv(M, tm)

    return pl.pallas_call(
        add_kernel,
        out_shape=jax.ShapeDtypeStruct((M, N), a.dtype),
        grid_spec=pltpu.PrefetchScalarGridSpec(
            num_scalar_prefetch=0,
            grid=(gm, gn),
            in_specs=[
                pl.BlockSpec((tm, tn), lambda i, j: (i, j)),
                pl.BlockSpec((tm, tn), lambda i, j: (i, j)),
            ],
            out_specs=pl.BlockSpec((tm, tn), lambda i, j: (i, j)),
        ),
        compiler_params=pltpu.CompilerParams(
            dimension_semantics=("parallel", "parallel"),
            vmem_limit_bytes=_VMEM_LIMIT,
        ),
        cost_estimate=_cost(M, N, itemsize),
    )(a, b)


def _to_2d(x):
    if x.ndim == 0:
        return x.reshape(1, 1)
    if x.ndim == 1:
        # Fold a flat vector into a lane-friendly 2-D shape when possible so
        # both grid axes can tile it; otherwise fall back to a single wide
        # row (the lane-axis tiling in _pallas_add_2d handles that case).
        T = x.shape[0]
        for lanes in (4096, 2048, 1024, 512, 256, 128):
            if T % lanes == 0:
                return x.reshape(T // lanes, lanes)
        return x.reshape(1, T)
    # Collapse leading dims; keep last dim as the lane axis.
    return x.reshape(-1, x.shape[-1])


def pallas_add(a, b):
    """Elementwise a + b (same shape/dtype), arbitrary rank."""
    assert a.shape == b.shape and a.dtype == b.dtype
    orig_shape = a.shape
    out = _pallas_add_2d(_to_2d(a), _to_2d(b))
    return out.reshape(orig_shape)


if __name__ == "__main__":
    key = jax.random.PRNGKey(0)
    k1, k2, k3, k4, k5, k6, k7, k8 = jax.random.split(key, 8)

    # 1) Tiny input: single-block fast path.
    a = jax.random.normal(k1, (256, 256), dtype=jnp.float32)
    b = jax.random.normal(k2, (256, 256), dtype=jnp.float32)
    out = pallas_add(a, b)
    jax.block_until_ready(out)
    assert jnp.allclose(out, a + b, atol=1e-6, rtol=1e-6)

    # 2) Tiled path with full-width lane-dense blocks (~5 MiB/array, f32).
    a2 = jax.random.normal(k3, (2048, 640), dtype=jnp.float32)
    b2 = jax.random.normal(k4, (2048, 640), dtype=jnp.float32)
    out2 = pallas_add(a2, b2)
    jax.block_until_ready(out2)
    assert jnp.allclose(out2, a2 + b2, atol=1e-6, rtol=1e-6)

    # 3) bf16: dtype-aware sublane alignment + even grid split (v7x).
    a3 = jax.random.normal(k5, (4096, 512), dtype=jnp.bfloat16)
    b3 = jax.random.normal(k6, (4096, 512), dtype=jnp.bfloat16)
    out3 = pallas_add(a3, b3)
    jax.block_until_ready(out3)
    assert jnp.array_equal(out3, a3 + b3)

    # 4) Flat 1-D input not divisible by 128: exercises lane-axis tiling.
    a4 = jax.random.normal(k7, ((1 << 20) + 7,), dtype=jnp.float32)
    b4 = jax.random.normal(k8, ((1 << 20) + 7,), dtype=jnp.float32)
    out4 = pallas_add(a4, b4)
    jax.block_until_ready(out4)
    assert jnp.allclose(out4, a4 + b4, atol=1e-6, rtol=1e-6)

    print("KERNEL_OK")
</pallas_src>

<mosaic_0001>
module attributes {stable_mosaic.version = 11 : i64} {
  func.func @add_kernel(%arg0: memref<256x256xf32, #tpu.memory_space<vmem>>, %arg1: memref<256x256xf32, #tpu.memory_space<vmem>>, %arg2: memref<256x256xf32, #tpu.memory_space<vmem>>) attributes {dimension_semantics = [], scalar_prefetch = 0 : i64, scratch_operands = 0 : i64, tpu.core_type = #tpu.core_type<tc>} {
    %c0 = arith.constant 0 : index
    %c0_0 = arith.constant 0 : index
    %0 = vector.load %arg0[%c0, %c0_0] : memref<256x256xf32, #tpu.memory_space<vmem>>, vector<256x256xf32>
    %c0_1 = arith.constant 0 : index
    %c0_2 = arith.constant 0 : index
    %1 = vector.load %arg1[%c0_1, %c0_2] : memref<256x256xf32, #tpu.memory_space<vmem>>, vector<256x256xf32>
    %2 = arith.addf %0, %1 : vector<256x256xf32>
    %c0_3 = arith.constant 0 : index
    %c0_4 = arith.constant 0 : index
    %3 = vector.load %arg2[%c0_3, %c0_4] : memref<256x256xf32, #tpu.memory_space<vmem>>, vector<256x256xf32>
    tpu.vector_store %arg2[%c0_3, %c0_4], %2 {strides = array<i32>} : memref<256x256xf32, #tpu.memory_space<vmem>>, vector<256x256xf32>,
    return
  }
}

</mosaic_0001>

<llo_original>
// kernel: tpu_custom_call.1
$region0: #{tpu_custom_call.1}
  #allocation0 [shape = 'u32[]', space=smem, size = 0x4, offset = 0x4, fixed_abs, tag = 'smem constant byte address 0x4 - core index']
  #allocation1 [shape = 'u32[144,128]{1,0:T(1,128)}', space=vmem, size = 0x12000, scoped, tag = 'internal scratch']
  %s0 = inlined_call_operand.hbm [shape: f32[256,256], index: 0, kind: input, shape index: {}]
  %s1 = inlined_call_operand.hbm [shape: f32[256,256], index: 1, kind: input, shape index: {}]
  %s2 = inlined_call_operand.hbm [shape: f32[256,256], index: 2, kind: output, shape index: {}]
  %s3 = sld [smem:[#allocation0]]
  $region26: #{tpu_custom_call.1} parent=0
    _
  %s5 = ssub.s32 1, %s3
  %s6 = scalar_select 0, %s5, %s3
  $region1: #{tpu_custom_call.1} parent=0
    #allocation2 [shape = 'u8[262144]{0}', space=vmem, size = 0x40000, scoped, tag = 'input window, operand 0, single buffered']
    #allocation3 [shape = 's32[1]{0}', space=sflag, size = 0x4, scoped, tag = 'scoped memory for tpu_custom_call.1']
    #allocation4 [shape = 's32[1]{0}', space=sflag, size = 0x4, scoped, tag = 'scoped memory for tpu_custom_call.1']
    #allocation5 [shape = 'u8[262144]{0}', space=vmem, size = 0x40000, scoped, tag = 'input window, operand 1, single buffered']
    #allocation6 [shape = 's32[1]{0}', space=sflag, size = 0x4, scoped, tag = 'scoped memory for tpu_custom_call.1']
    #allocation7 [shape = 'u8[262144]{0}', space=vmem, size = 0x40000, scoped, tag = 'output window, operand 0, single buffered']
    %7 = vsyncpa [#allocation3], 0
    %8 = vsyncpa [#allocation6], 0
    %9 = vsyncpa [#allocation4], 0
    // Predicated region
    $region2: #{tpu_custom_call.1} parent=1 // pred_check
      _
    $region3: #{tpu_custom_call.1} parent=1 // pred_check_branch
      %11 = sbr.rel (0) target = $region5
    $region4: #{tpu_custom_call.1} parent=1 // pred_region
      %s13 = ssub.s32 8192, 8192
      %14 = vsyncadd [#allocation3], %s13
      %s15 = sshll.u32 [#allocation2], 4
      %s16 = int_to_ptr.vmem [resolvable:$true] %s15
      %21 = dma.hbm_to_vmem [thread:$0]  %s0, 8192, %s16, [#allocation3], 256, 256, 16
    $region5: #{tpu_custom_call.1} parent=1 // pred_fallthru
      _
    // Predicated region
    $region6: #{tpu_custom_call.1} parent=1 // pred_check
      _
    $region7: #{tpu_custom_call.1} parent=1 // pred_check_branch
      %23 = sbr.rel (0) target = $region9
    $region8: #{tpu_custom_call.1} parent=1 // pred_region
      %s25 = ssub.s32 8192, 8192
      %26 = vsyncadd [#allocation6], %s25
      %s27 = sshll.u32 [#allocation5], 4
      %s28 = int_to_ptr.vmem [resolvable:$true] %s27
      %33 = dma.hbm_to_vmem [thread:$0]  %s1, 8192, %s28, [#allocation6], 256, 256, 16
    $region9: #{tpu_custom_call.1} parent=1 // pred_fallthru
      _
    // Predicated region
    $region10: #{tpu_custom_call.1} parent=1 // pred_check
      _
    $region11: #{tpu_custom_call.1} parent=1 // pred_check_branch
      %35 = sbr.rel (0) target = $region13
    $region12: #{tpu_custom_call.1} parent=1 // pred_region
      %36 = dma.done [#allocation3], 8192
    $region13: #{tpu_custom_call.1} parent=1 // pred_fallthru
      _
    // Predicated region
    $region14: #{tpu_custom_call.1} parent=1 // pred_check
      _
    $region15: #{tpu_custom_call.1} parent=1 // pred_check_branch
      %38 = sbr.rel (0) target = $region17
    $region16: #{tpu_custom_call.1} parent=1 // pred_region
      %39 = dma.done [#allocation6], 8192
    $region17: #{tpu_custom_call.1} parent=1 // pred_fallthru
      _
    %v40 = vld [vmem:[#allocation2] sm:$0xff]
    %v41 = vld [vmem:[#allocation2 + $0x8] sm:$0xff]
    %v42 = vld [vmem:[#allocation2 + $0x10] sm:$0xff]
    %v43 = vld [vmem:[#allocation2 + $0x18] sm:$0xff]
    %v44 = vld [vmem:[#allocation2 + $0x20] sm:$0xff]
    %v45 = vld [vmem:[#allocation2 + $0x28] sm:$0xff]
    %v46 = vld [vmem:[#allocation2 + $0x30] sm:$0xff]
    %v47 = vld [vmem:[#allocation2 + $0x38] sm:$0xff]
    %v48 = vld [vmem:[#allocation2 + $0x40] sm:$0xff]
    %v49 = vld [vmem:[#allocation2 + $0x48] sm:$0xff]
    %v50 = vld [vmem:[#allocation2 + $0x50] sm:$0xff]
    %v51 = vld [vmem:[#allocation2 + $0x58] sm:$0xff]
    %v52 = vld [vmem:[#allocation2 + $0x60] sm:$0xff]
    %v53 = vld [vmem:[#allocation2 + $0x68] sm:$0xff]
    %v54 = vld [vmem:[#allocation2 + $0x70] sm:$0xff]
    %v55 = vld [vmem:[#allocation2 + $0x78] sm:$0xff]
    %v56 = vld [vmem:[#allocation2 + $0x80] sm:$0xff]
    %v57 = vld [vmem:[#allocation2 + $0x88] sm:$0xff]
    %v58 = vld [vmem:[#allocation2 + $0x90] sm:$0xff]
    %v59 = vld [vmem:[#allocation2 + $0x98] sm:$0xff]
    %v60 = vld [vmem:[#allocation2 + $0xa0] sm:$0xff]
    %v61 = vld [vmem:[#allocation2 + $0xa8] sm:$0xff]
    %v62 = vld [vmem:[#allocation2 + $0xb0] sm:$0xff]
    %v63 = vld [vmem:[#allocation2 + $0xb8] sm:$0xff]
    %v64 = vld [vmem:[#allocation2 + $0xc0] sm:$0xff]
    %v65 = vld [vmem:[#allocation2 + $0xc8] sm:$0xff]
    %v66 = vld [vmem:[#allocation2 + $0xd0] sm:$0xff]
    %v67 = vld [vmem:[#allocation2 + $0xd8] sm:$0xff]
    %v68 = vld [vmem:[#allocation2 + $0xe0] sm:$0xff]
    %v69 = vld [vmem:[#allocation2 + $0xe8] sm:$0xff]
    %v70 = vld [vmem:[#allocation2 + $0xf0] sm:$0xff]
    %v71 = vld [vmem:[#allocation2 + $0xf8] sm:$0xff]
    %v72 = vld [vmem:[#allocation2 + $0x100] sm:$0xff]
    %v73 = vld [vmem:[#allocation2 + $0x108] sm:$0xff]
    %v74 = vld [vmem:[#allocation2 + $0x110] sm:$0xff]
    %v75 = vld [vmem:[#allocation2 + $0x118] sm:$0xff]
    %v76 = vld [vmem:[#allocation2 + $0x120] sm:$0xff]
    %v77 = vld [vmem:[#allocation2 + $0x128] sm:$0xff]
    %v78 = vld [vmem:[#allocation2 + $0x130] sm:$0xff]
    %v79 = vld [vmem:[#allocation2 + $0x138] sm:$0xff]
    %v80 = vld [vmem:[#allocation2 + $0x140] sm:$0xff]
    %v81 = vld [vmem:[#allocation2 + $0x148] sm:$0xff]
    %v82 = vld [vmem:[#allocation2 + $0x150] sm:$0xff]
    %v83 = vld [vmem:[#allocation2 + $0x158] sm:$0xff]
    %v84 = vld [vmem:[#allocation2 + $0x160] sm:$0xff]
    %v85 = vld [vmem:[#allocation2 + $0x168] sm:$0xff]
    %v86 = vld [vmem:[#allocation2 + $0x170] sm:$0xff]
    %v87 = vld [vmem:[#allocation2 + $0x178] sm:$0xff]
    %v88 = vld [vmem:[#allocation2 + $0x180] sm:$0xff]
    %v89 = vld [vmem:[#allocation2 + $0x188] sm:$0xff]
    %v90 = vld [vmem:[#allocation2 + $0x190] sm:$0xff]
    %v91 = vld [vmem:[#allocation2 + $0x198] sm:$0xff]
    %v92 = vld [vmem:[#allocation2 + $0x1a0] sm:$0xff]
    %v93 = vld [vmem:[#allocation2 + $0x1a8] sm:$0xff]
    %v94 = vld [vmem:[#allocation2 + $0x1b0] sm:$0xff]
    %v95 = vld [vmem:[#allocation2 + $0x1b8] sm:$0xff]
    %v96 = vld [vmem:[#allocation2 + $0x1c0] sm:$0xff]
    %v97 = vld [vmem:[#allocation2 + $0x1c8] sm:$0xff]
    %v98 = vld [vmem:[#allocation2 + $0x1d0] sm:$0xff]
    %v99 = vld [vmem:[#allocation2 + $0x1d8] sm:$0xff]
    %v100 = vld [vmem:[#allocation2 + $0x1e0] sm:$0xff]
    %v101 = vld [vmem:[#allocation2 + $0x1e8] sm:$0xff]
    %v102 = vld [vmem:[#allocation2 + $0x1f0] sm:$0xff]
    %v103 = vld [vmem:[#allocation2 + $0x1f8] sm:$0xff]
    %v104 = vld [vmem:[#allocation5] sm:$0xff]
    %v105 = vld [vmem:[#allocation5 + $0x8] sm:$0xff]
    %v106 = vld [vmem:[#allocation5 + $0x10] sm:$0xff]
    %v107 = vld [vmem:[#allocation5 + $0x18] sm:$0xff]
    %v108 = vld [vmem:[#allocation5 + $0x20] sm:$0xff]
    %v109 = vld [vmem:[#allocation5 + $0x28] sm:$0xff]
    %v110 = vld [vmem:[#allocation5 + $0x30] sm:$0xff]
    %v111 = vld [vmem:[#allocation5 + $0x38] sm:$0xff]
    %v112 = vld [vmem:[#allocation5 + $0x40] sm:$0xff]
    %v113 = vld [vmem:[#allocation5 + $0x48] sm:$0xff]
    %v114 = vld [vmem:[#allocation5 + $0x50] sm:$0xff]
    %v115 = vld [vmem:[#allocation5 + $0x58] sm:$0xff]
    %v116 = vld [vmem:[#allocation5 + $0x60] sm:$0xff]
    %v117 = vld [vmem:[#allocation5 + $0x68] sm:$0xff]
    %v118 = vld [vmem:[#allocation5 + $0x70] sm:$0xff]
    %v119 = vld [vmem:[#allocation5 + $0x78] sm:$0xff]
    %v120 = vld [vmem:[#allocation5 + $0x80] sm:$0xff]
    %v121 = vld [vmem:[#allocation5 + $0x88] sm:$0xff]
    %v122 = vld [vmem:[#allocation5 + $0x90] sm:$0xff]
    %v123 = vld [vmem:[#allocation5 + $0x98] sm:$0xff]
    %v124 = vld [vmem:[#allocation5 + $0xa0] sm:$0xff]
    %v125 = vld [vmem:[#allocation5 + $0xa8] sm:$0xff]
    %v126 = vld [vmem:[#allocation5 + $0xb0] sm:$0xff]
    %v127 = vld [vmem:[#allocation5 + $0xb8] sm:$0xff]
    %v128 = vld [vmem:[#allocation5 + $0xc0] sm:$0xff]
    %v129 = vld [vmem:[#allocation5 + $0xc8] sm:$0xff]
    %v130 = vld [vmem:[#allocation5 + $0xd0] sm:$0xff]
    %v131 = vld [vmem:[#allocation5 + $0xd8] sm:$0xff]
    %v132 = vld [vmem:[#allocation5 + $0xe0] sm:$0xff]
    %v133 = vld [vmem:[#allocation5 + $0xe8] sm:$0xff]
    %v134 = vld [vmem:[#allocation5 + $0xf0] sm:$0xff]
    %v135 = vld [vmem:[#allocation5 + $0xf8] sm:$0xff]
    %v136 = vld [vmem:[#allocation5 + $0x100] sm:$0xff]
    %v137 = vld [vmem:[#allocation5 + $0x108] sm:$0xff]
    %v138 = vld [vmem:[#allocation5 + $0x110] sm:$0xff]
    %v139 = vld [vmem:[#allocation5 + $0x118] sm:$0xff]
    %v140 = vld [vmem:[#allocation5 + $0x120] sm:$0xff]
    %v141 = vld [vmem:[#allocation5 + $0x128] sm:$0xff]
    %v142 = vld [vmem:[#allocation5 + $0x130] sm:$0xff]
    %v143 = vld [vmem:[#allocation5 + $0x138] sm:$0xff]
    %v144 = vld [vmem:[#allocation5 + $0x140] sm:$0xff]
    %v145 = vld [vmem:[#allocation5 + $0x148] sm:$0xff]
    %v146 = vld [vmem:[#allocation5 + $0x150] sm:$0xff]
    %v147 = vld [vmem:[#allocation5 + $0x158] sm:$0xff]
    %v148 = vld [vmem:[#allocation5 + $0x160] sm:$0xff]
    %v149 = vld [vmem:[#allocation5 + $0x168] sm:$0xff]
    %v150 = vld [vmem:[#allocation5 + $0x170] sm:$0xff]
    %v151 = vld [vmem:[#allocation5 + $0x178] sm:$0xff]
    %v152 = vld [vmem:[#allocation5 + $0x180] sm:$0xff]
    %v153 = vld [vmem:[#allocation5 + $0x188] sm:$0xff]
    %v154 = vld [vmem:[#allocation5 + $0x190] sm:$0xff]
    %v155 = vld [vmem:[#allocation5 + $0x198] sm:$0xff]
    %v156 = vld [vmem:[#allocation5 + $0x1a0] sm:$0xff]
    %v157 = vld [vmem:[#allocation5 + $0x1a8] sm:$0xff]
    %v158 = vld [vmem:[#allocation5 + $0x1b0] sm:$0xff]
    %v159 = vld [vmem:[#allocation5 + $0x1b8] sm:$0xff]
    %v160 = vld [vmem:[#allocation5 + $0x1c0] sm:$0xff]
    %v161 = vld [vmem:[#allocation5 + $0x1c8] sm:$0xff]
    %v162 = vld [vmem:[#allocation5 + $0x1d0] sm:$0xff]
    %v163 = vld [vmem:[#allocation5 + $0x1d8] sm:$0xff]
    %v164 = vld [vmem:[#allocation5 + $0x1e0] sm:$0xff]
    %v165 = vld [vmem:[#allocation5 + $0x1e8] sm:$0xff]
    %v166 = vld [vmem:[#allocation5 + $0x1f0] sm:$0xff]
    %v167 = vld [vmem:[#allocation5 + $0x1f8] sm:$0xff]
    %v168 = vadd.f32 %v40, %v104
    %v169 = vadd.f32 %v41, %v105
    %v170 = vadd.f32 %v42, %v106
    %v171 = vadd.f32 %v43, %v107
    %v172 = vadd.f32 %v44, %v108
    %v173 = vadd.f32 %v45, %v109
    %v174 = vadd.f32 %v46, %v110
    %v175 = vadd.f32 %v47, %v111
    %v176 = vadd.f32 %v48, %v112
    %v177 = vadd.f32 %v49, %v113
    %v178 = vadd.f32 %v50, %v114
    %v179 = vadd.f32 %v51, %v115
    %v180 = vadd.f32 %v52, %v116
    %v181 = vadd.f32 %v53, %v117
    %v182 = vadd.f32 %v54, %v118
    %v183 = vadd.f32 %v55, %v119
    %v184 = vadd.f32 %v56, %v120
    %v185 = vadd.f32 %v57, %v121
    %v186 = vadd.f32 %v58, %v122
    %v187 = vadd.f32 %v59, %v123
    %v188 = vadd.f32 %v60, %v124
    %v189 = vadd.f32 %v61, %v125
    %v190 = vadd.f32 %v62, %v126
    %v191 = vadd.f32 %v63, %v127
    %v192 = vadd.f32 %v64, %v128
    %v193 = vadd.f32 %v65, %v129
    %v194 = vadd.f32 %v66, %v130
    %v195 = vadd.f32 %v67, %v131
    %v196 = vadd.f32 %v68, %v132
    %v197 = vadd.f32 %v69, %v133
    %v198 = vadd.f32 %v70, %v134
    %v199 = vadd.f32 %v71, %v135
    %v200 = vadd.f32 %v72, %v136
    %v201 = vadd.f32 %v73, %v137
    %v202 = vadd.f32 %v74, %v138
    %v203 = vadd.f32 %v75, %v139
    %v204 = vadd.f32 %v76, %v140
    %v205 = vadd.f32 %v77, %v141
    %v206 = vadd.f32 %v78, %v142
    %v207 = vadd.f32 %v79, %v143
    %v208 = vadd.f32 %v80, %v144
    %v209 = vadd.f32 %v81, %v145
    %v210 = vadd.f32 %v82, %v146
    %v211 = vadd.f32 %v83, %v147
    %v212 = vadd.f32 %v84, %v148
    %v213 = vadd.f32 %v85, %v149
    %v214 = vadd.f32 %v86, %v150
    %v215 = vadd.f32 %v87, %v151
    %v216 = vadd.f32 %v88, %v152
    %v217 = vadd.f32 %v89, %v153
    %v218 = vadd.f32 %v90, %v154
    %v219 = vadd.f32 %v91, %v155
    %v220 = vadd.f32 %v92, %v156
    %v221 = vadd.f32 %v93, %v157
    %v222 = vadd.f32 %v94, %v158
    %v223 = vadd.f32 %v95, %v159
    %v224 = vadd.f32 %v96, %v160
    %v225 = vadd.f32 %v97, %v161
    %v226 = vadd.f32 %v98, %v162
    %v227 = vadd.f32 %v99, %v163
    %v228 = vadd.f32 %v100, %v164
    %v229 = vadd.f32 %v101, %v165
    %v230 = vadd.f32 %v102, %v166
    %v231 = vadd.f32 %v103, %v167
    %232 = vst [vmem:[#allocation7] sm:$0xff] %v168
    %233 = vst [vmem:[#allocation7 + $0x8] sm:$0xff] %v169
    %234 = vst [vmem:[#allocation7 + $0x10] sm:$0xff] %v170
    %235 = vst [vmem:[#allocation7 + $0x18] sm:$0xff] %v171
    %236 = vst [vmem:[#allocation7 + $0x20] sm:$0xff] %v172
    %237 = vst [vmem:[#allocation7 + $0x28] sm:$0xff] %v173
    %238 = vst [vmem:[#allocation7 + $0x30] sm:$0xff] %v174
    %239 = vst [vmem:[#allocation7 + $0x38] sm:$0xff] %v175
    %240 = vst [vmem:[#allocation7 + $0x40] sm:$0xff] %v176
    %241 = vst [vmem:[#allocation7 + $0x48] sm:$0xff] %v177
    %242 = vst [vmem:[#allocation7 + $0x50] sm:$0xff] %v178
    %243 = vst [vmem:[#allocation7 + $0x58] sm:$0xff] %v179
    %244 = vst [vmem:[#allocation7 + $0x60] sm:$0xff] %v180
    %245 = vst [vmem:[#allocation7 + $0x68] sm:$0xff] %v181
    %246 = vst [vmem:[#allocation7 + $0x70] sm:$0xff] %v182
    %247 = vst [vmem:[#allocation7 + $0x78] sm:$0xff] %v183
    %248 = vst [vmem:[#allocation7 + $0x80] sm:$0xff] %v184
    %249 = vst [vmem:[#allocation7 + $0x88] sm:$0xff] %v185
    %250 = vst [vmem:[#allocation7 + $0x90] sm:$0xff] %v186
    %251 = vst [vmem:[#allocation7 + $0x98] sm:$0xff] %v187
    %252 = vst [vmem:[#allocation7 + $0xa0] sm:$0xff] %v188
    %253 = vst [vmem:[#allocation7 + $0xa8] sm:$0xff] %v189
    %254 = vst [vmem:[#allocation7 + $0xb0] sm:$0xff] %v190
    %255 = vst [vmem:[#allocation7 + $0xb8] sm:$0xff] %v191
    %256 = vst [vmem:[#allocation7 + $0xc0] sm:$0xff] %v192
    %257 = vst [vmem:[#allocation7 + $0xc8] sm:$0xff] %v193
    %258 = vst [vmem:[#allocation7 + $0xd0] sm:$0xff] %v194
    %259 = vst [vmem:[#allocation7 + $0xd8] sm:$0xff] %v195
    %260 = vst [vmem:[#allocation7 + $0xe0] sm:$0xff] %v196
    %261 = vst [vmem:[#allocation7 + $0xe8] sm:$0xff] %v197
    %262 = vst [vmem:[#allocation7 + $0xf0] sm:$0xff] %v198
    %263 = vst [vmem:[#allocation7 + $0xf8] sm:$0xff] %v199
    %264 = vst [vmem:[#allocation7 + $0x100] sm:$0xff] %v200
    %265 = vst [vmem:[#allocation7 + $0x108] sm:$0xff] %v201
    %266 = vst [vmem:[#allocation7 + $0x110] sm:$0xff] %v202
    %267 = vst [vmem:[#allocation7 + $0x118] sm:$0xff] %v203
    %268 = vst [vmem:[#allocation7 + $0x120] sm:$0xff] %v204
    %269 = vst [vmem:[#allocation7 + $0x128] sm:$0xff] %v205
    %270 = vst [vmem:[#allocation7 + $0x130] sm:$0xff] %v206
    %271 = vst [vmem:[#allocation7 + $0x138] sm:$0xff] %v207
    %272 = vst [vmem:[#allocation7 + $0x140] sm:$0xff] %v208
    %273 = vst [vmem:[#allocation7 + $0x148] sm:$0xff] %v209
    %274 = vst [vmem:[#allocation7 + $0x150] sm:$0xff] %v210
    %275 = vst [vmem:[#allocation7 + $0x158] sm:$0xff] %v211
    %276 = vst [vmem:[#allocation7 + $0x160] sm:$0xff] %v212
    %277 = vst [vmem:[#allocation7 + $0x168] sm:$0xff] %v213
    %278 = vst [vmem:[#allocation7 + $0x170] sm:$0xff] %v214
    %279 = vst [vmem:[#allocation7 + $0x178] sm:$0xff] %v215
    %280 = vst [vmem:[#allocation7 + $0x180] sm:$0xff] %v216
    %281 = vst [vmem:[#allocation7 + $0x188] sm:$0xff] %v217
    %282 = vst [vmem:[#allocation7 + $0x190] sm:$0xff] %v218
    %283 = vst [vmem:[#allocation7 + $0x198] sm:$0xff] %v219
    %284 = vst [vmem:[#allocation7 + $0x1a0] sm:$0xff] %v220
    %285 = vst [vmem:[#allocation7 + $0x1a8] sm:$0xff] %v221
    %286 = vst [vmem:[#allocation7 + $0x1b0] sm:$0xff] %v222
    %287 = vst [vmem:[#allocation7 + $0x1b8] sm:$0xff] %v223
    %288 = vst [vmem:[#allocation7 + $0x1c0] sm:$0xff] %v224
    %289 = vst [vmem:[#allocation7 + $0x1c8] sm:$0xff] %v225
    %290 = vst [vmem:[#allocation7 + $0x1d0] sm:$0xff] %v226
    %291 = vst [vmem:[#allocation7 + $0x1d8] sm:$0xff] %v227
    %292 = vst [vmem:[#allocation7 + $0x1e0] sm:$0xff] %v228
    %293 = vst [vmem:[#allocation7 + $0x1e8] sm:$0xff] %v229
    %294 = vst [vmem:[#allocation7 + $0x1f0] sm:$0xff] %v230
    %295 = vst [vmem:[#allocation7 + $0x1f8] sm:$0xff] %v231
    // Predicated region
    $region18: #{tpu_custom_call.1} parent=1 // pred_check
      _
    $region19: #{tpu_custom_call.1} parent=1 // pred_check_branch
      %297 = sbr.rel (0) target = $region21
    $region20: #{tpu_custom_call.1} parent=1 // pred_region
      %s299 = ssub.s32 8192, 8192
      %300 = vsyncadd [#allocation4], %s299
      %s301 = sshll.u32 [#allocation7], 4
      %s302 = int_to_ptr.vmem [resolvable:$true] %s301
      %307 = dma.vmem_to_hbm [thread:$0]  %s302, 8192, %s2, [#allocation4], 256, 256, 16
    $region21: #{tpu_custom_call.1} parent=1 // pred_fallthru
      _
    // Predicated region
    $region22: #{tpu_custom_call.1} parent=1 // pred_check
      _
    $region23: #{tpu_custom_call.1} parent=1 // pred_check_branch
      %309 = sbr.rel (0) target = $region25
    $region24: #{tpu_custom_call.1} parent=1 // pred_region
      %310 = dma.done [#allocation4], 8192
    $region25: #{tpu_custom_call.1} parent=1 // pred_fallthru
      _
    %311 = vsyncpa [#allocation3], 1
    %312 = vsyncpa [#allocation6], 1
    %313 = vsyncpa [#allocation4], 1

</llo_original>
